<compile_context>
chip_gen: v6e
topology: v6e:2x2x1
jax: 0.10.0
libtpu: 0.0.40
codegen_flags: <defaults>
</compile_context>

<pallas_src>
import functools
import math

import jax
import jax.numpy as jnp
from jax.experimental import pallas as pl
from jax.experimental.pallas import tpu as pltpu


def _round_up(x, m):
    return -(-x // m) * m


def _linear_kernel(x_ref, w_ref, b_ref, o_ref):
    # x_ref: (tm, d) f32; w_ref: (d, F) f32; b_ref: (1, F) f32; o_ref: (tm, F) f32
    y = jnp.dot(x_ref[...], w_ref[...], preferred_element_type=jnp.float32)
    o_ref[...] = (y + b_ref[...]).astype(o_ref.dtype)


def _rot_vel_kernel(x_ref, wv_ref, bv_ref, wp_ref, bp_ref, o_ref, *,
                    first_rows, tm, pose_rows):
    # velFinal for the whole tile; poseFinal only for global rows < first_rows
    # (frame 0), computed on just the first `pose_rows` rows of the tile.
    i = pl.program_id(0)
    yv = (jnp.dot(x_ref[...], wv_ref[...], preferred_element_type=jnp.float32)
          + bv_ref[...])
    o_ref[...] = yv.astype(o_ref.dtype)

    @pl.when(i * tm < first_rows)
    def _():
        r = pose_rows  # static, multiple of 8 (or == tm)
        yp = (jnp.dot(x_ref[pl.ds(0, r), :], wp_ref[...],
                      preferred_element_type=jnp.float32) + bp_ref[...])
        row = i * tm + jax.lax.broadcasted_iota(jnp.int32, (r, yp.shape[1]), 0)
        blended = jnp.where(row < first_rows, yp, yv[:r, :])
        o_ref[pl.ds(0, r), :] = blended.astype(o_ref.dtype)


def output_process_forward(x, params, *, data_rep, njoints, nfeats, tm_max=128):
    """x: (nframes, bs, latent_dim) float32. Returns (bs, njoints, nfeats, nframes)."""
    nframes, bs, d = x.shape
    F = njoints * nfeats
    M = nframes * bs

    tm = min(tm_max, M)              # no M padding; ragged last block handled by Pallas
    grid = (pl.cdiv(M, tm),)

    x_flat = x.reshape(M, d)         # contiguous reshape: no copy, no cast, no pad

    x_spec = pl.BlockSpec((tm, d), lambda i: (i, 0))
    w_spec = pl.BlockSpec((d, F), lambda i: (0, 0))     # resident across the grid
    b_spec = pl.BlockSpec((1, F), lambda i: (0, 0))
    o_spec = pl.BlockSpec((tm, F), lambda i: (i, 0))
    out_shape = jax.ShapeDtypeStruct((M, F), jnp.float32)
    cparams = pltpu.CompilerParams(dimension_semantics=("parallel",))

    wp = params["pose_w"].astype(jnp.float32)
    bp = params["pose_b"].astype(jnp.float32)[None, :]

    if data_rep in ("rot6d", "xyz", "hml_vec", "mid"):
        cost = pl.CostEstimate(
            flops=2 * M * d * F,
            transcendentals=0,
            bytes_accessed=(M * d + d * F + F + M * F) * 4,
        )
        y = pl.pallas_call(
            _linear_kernel,
            out_shape=out_shape,
            grid_spec=pltpu.PrefetchScalarGridSpec(
                num_scalar_prefetch=0,
                grid=grid,
                in_specs=[x_spec, w_spec, b_spec],
                out_specs=o_spec,
            ),
            compiler_params=cparams,
            cost_estimate=cost,
        )(x_flat, wp, bp)
    elif data_rep == "rot_vel":
        wv = params["vel_w"].astype(jnp.float32)
        bv = params["vel_b"].astype(jnp.float32)[None, :]
        pose_rows = min(tm, _round_up(bs, 8))
        kern = functools.partial(_rot_vel_kernel, first_rows=bs, tm=tm,
                                 pose_rows=pose_rows)
        cost = pl.CostEstimate(
            flops=2 * M * d * F + 2 * pose_rows * d * F,
            transcendentals=0,
            bytes_accessed=(M * d + 2 * d * F + 2 * F + M * F) * 4,
        )
        y = pl.pallas_call(
            kern,
            out_shape=out_shape,
            grid_spec=pltpu.PrefetchScalarGridSpec(
                num_scalar_prefetch=0,
                grid=grid,
                in_specs=[x_spec, w_spec, b_spec, w_spec, b_spec],
                out_specs=o_spec,
            ),
            compiler_params=cparams,
            cost_estimate=cost,
        )(x_flat, wv, bv, wp, bp)
    else:
        raise ValueError(data_rep)

    # Glue: reshape + permute left in XLA on purpose — it now touches exactly
    # M*F useful elements (no padded slab), and folding the transpose into the
    # kernel only pays once nframes is lane-scale (>=128).
    y = y.reshape(nframes, bs, njoints, nfeats)
    return jnp.transpose(y, (1, 2, 3, 0))               # (bs, njoints, nfeats, nframes)


def _init_linear(key, fan_in, fan_out):
    # Deterministic nn.Linear-style init: U(-1/sqrt(fan_in), 1/sqrt(fan_in)).
    kw, kb = jax.random.split(key)
    bound = 1.0 / math.sqrt(fan_in)
    w = jax.random.uniform(kw, (fan_in, fan_out), jnp.float32, -bound, bound)
    b = jax.random.uniform(kb, (fan_out,), jnp.float32, -bound, bound)
    return w, b


def _reference(x, params, *, data_rep, njoints, nfeats):
    # Pure-JAX f32 reference (matches the PyTorch f32 nn.Linear semantics).
    nframes, bs, d = x.shape
    wp = params["pose_w"]
    bp = params["pose_b"]
    if data_rep in ("rot6d", "xyz", "hml_vec", "mid"):
        y = jnp.dot(x, wp) + bp
    elif data_rep == "rot_vel":
        wv = params["vel_w"]
        bv = params["vel_b"]
        first = jnp.dot(x[:1], wp) + bp
        vel = jnp.dot(x[1:], wv) + bv
        y = jnp.concatenate([first, vel], axis=0)
    else:
        raise ValueError(data_rep)
    y = y.reshape(nframes, bs, njoints, nfeats)
    return jnp.transpose(y, (1, 2, 3, 0))


if __name__ == "__main__":
    # Small shapes implied by the forward: seq (nframes)=8, batch=2,
    # latent_dim=32, njoints=4, nfeats=4 -> input_feats=16.
    nframes, bs, latent_dim = 8, 2, 32
    njoints, nfeats = 4, 4

    root = jax.random.PRNGKey(0)
    k_x, k_pose, k_vel = jax.random.split(root, 3)

    x = jax.random.normal(k_x, (nframes, bs, latent_dim), jnp.float32)

    pose_w, pose_b = _init_linear(k_pose, latent_dim, njoints * nfeats)
    vel_w, vel_b = _init_linear(k_vel, latent_dim, njoints * nfeats)
    params = {"pose_w": pose_w, "pose_b": pose_b, "vel_w": vel_w, "vel_b": vel_b}

    ok = True
    for data_rep in ("hml_vec", "rot_vel"):
        out = output_process_forward(
            x, params, data_rep=data_rep, njoints=njoints, nfeats=nfeats
        )
        out = jax.block_until_ready(out)
        ref = _reference(x, params, data_rep=data_rep, njoints=njoints, nfeats=nfeats)
        assert out.shape == (bs, njoints, nfeats, nframes), out.shape
        # Tolerance covers possible MXU f32-precision differences between the
        # Pallas matmul and XLA's default-precision reference dot.
        ok = ok and bool(jnp.allclose(out, ref, atol=2e-2, rtol=2e-2))

    if ok:
        print("KERNEL_OK")
</pallas_src>

<mosaic_0001>
module attributes {stable_mosaic.version = 11 : i64} {
  func.func @_linear_kernel(%arg0: i32, %arg1: memref<16x32xf32, #tpu.memory_space<vmem>>, %arg2: memref<32x16xf32, #tpu.memory_space<vmem>>, %arg3: memref<1x16xf32, #tpu.memory_space<vmem>>, %arg4: memref<16x16xf32, #tpu.memory_space<vmem>>) attributes {dimension_semantics = [#tpu.dimension_semantics<parallel>], iteration_bounds = array<i64: 1>, scalar_prefetch = 0 : i64, scratch_operands = 0 : i64, tpu.core_type = #tpu.core_type<tc>, window_params = [{transform_indices = @transform_0, window_bounds = array<i64: 16, 32>}, {pipeline_mode = #tpu.pipeline_mode<synchronous>, transform_indices = @transform_1, window_bounds = array<i64: 32, 16>}, {pipeline_mode = #tpu.pipeline_mode<synchronous>, transform_indices = @transform_2, window_bounds = array<i64: 1, 16>}, {transform_indices = @transform_3, window_bounds = array<i64: 16, 16>}]} {
    %c0 = arith.constant 0 : index
    %c0_0 = arith.constant 0 : index
    %0 = vector.load %arg1[%c0, %c0_0] : memref<16x32xf32, #tpu.memory_space<vmem>>, vector<16x32xf32>
    %c0_1 = arith.constant 0 : index
    %c0_2 = arith.constant 0 : index
    %1 = vector.load %arg2[%c0_1, %c0_2] : memref<32x16xf32, #tpu.memory_space<vmem>>, vector<32x16xf32>
    %cst = arith.constant dense<0.000000e+00> : vector<16x16xf32>
    %2 = tpu.matmul %0, %1, %cst {dimension_numbers = #tpu.dot_dimension_numbers<[1], [0], [0], [1], [0, 0, 1, 1], [], []>} : vector<16x32xf32>, vector<32x16xf32>, vector<16x16xf32> -> vector<16x16xf32>
    %c0_3 = arith.constant 0 : index
    %c0_4 = arith.constant 0 : index
    %3 = vector.load %arg3[%c0_3, %c0_4] : memref<1x16xf32, #tpu.memory_space<vmem>>, vector<1x16xf32>
    %4 = vector.broadcast %3 : vector<1x16xf32> to vector<16x16xf32>
    %5 = arith.addf %2, %4 : vector<16x16xf32>
    %c0_5 = arith.constant 0 : index
    %c0_6 = arith.constant 0 : index
    %6 = vector.load %arg4[%c0_5, %c0_6] : memref<16x16xf32, #tpu.memory_space<vmem>>, vector<16x16xf32>
    tpu.vector_store %arg4[%c0_5, %c0_6], %5 {strides = array<i32>} : memref<16x16xf32, #tpu.memory_space<vmem>>, vector<16x16xf32>,
    return
  }
  func.func @transform_0(%arg0: i32) -> (i32, i32) {
    %c0_i32 = arith.constant 0 : i32
    %c0_i32_0 = arith.constant 0 : i32
    return %arg0, %c0_i32 : i32, i32
  }
  func.func @transform_1(%arg0: i32) -> (i32, i32) {
    %c0_i32 = arith.constant 0 : i32
    %c0_i32_0 = arith.constant 0 : i32
    %c0_i32_1 = arith.constant 0 : i32
    return %c0_i32, %c0_i32_0 : i32, i32
  }
  func.func @transform_2(%arg0: i32) -> (i32, i32) {
    %c0_i32 = arith.constant 0 : i32
    %c0_i32_0 = arith.constant 0 : i32
    %c0_i32_1 = arith.constant 0 : i32
    return %c0_i32, %c0_i32_0 : i32, i32
  }
  func.func @transform_3(%arg0: i32) -> (i32, i32) {
    %c0_i32 = arith.constant 0 : i32
    %c0_i32_0 = arith.constant 0 : i32
    return %arg0, %c0_i32 : i32, i32
  }
}

</mosaic_0001>

<llo_original>
// kernel: tpu_custom_call.1
$region0: #{tpu_custom_call.1}
  #allocation0 [shape = 'u32[]', space=smem, size = 0x4, offset = 0x4, fixed_abs, tag = 'smem constant byte address 0x4 - core index']
  #allocation1 [shape = 'u32[144,128]{1,0:T(1,128)}', space=vmem, size = 0x12000, scoped, tag = 'internal scratch']
  %s0 = inlined_call_operand.vmem [shape: f32[16,32], index: 0, kind: input, shape index: {}]
  %s1 = inlined_call_operand.vmem [shape: f32[32,16], index: 1, kind: input, shape index: {}]
  %s2 = inlined_call_operand.vmem [shape: f32[1,16], index: 2, kind: input, shape index: {}]
  %s3 = inlined_call_operand.hbm [shape: f32[16,16], index: 3, kind: output, shape index: {}]
  %s4 = sld [smem:[#allocation0]]
  $region22: #{tpu_custom_call.1} parent=0
    _
  %s6 = ssub.s32 1, %s4
  %s7 = scalar_select 0, %s6, %s4
  $region1: #{tpu_custom_call.1} parent=0
    #allocation2 [shape = 'u8[8192]{0}', space=vmem, size = 0x2000, scoped, tag = 'output window, operand 0, single buffered']
    #allocation3 [shape = 's32[1]{0}', space=sflag, size = 0x4, scoped, tag = 'scoped memory for tpu_custom_call.1']
    %8 = vsyncpa [#allocation3], 0
    // Predicated region
    $region2: #{tpu_custom_call.1} parent=1 // pred_check
      _
    $region3: #{tpu_custom_call.1} parent=1 // pred_check_branch
      %10 = sbr.rel (0) target = $region5
    $region4: #{tpu_custom_call.1} parent=1 // pred_region
      _
    $region5: #{tpu_custom_call.1} parent=1 // pred_fallthru
      _
    // Predicated region
    $region6: #{tpu_custom_call.1} parent=1 // pred_check
      _
    $region7: #{tpu_custom_call.1} parent=1 // pred_check_branch
      %12 = sbr.rel (0) target = $region9
    $region8: #{tpu_custom_call.1} parent=1 // pred_region
      _
    $region9: #{tpu_custom_call.1} parent=1 // pred_fallthru
      _
    // Predicated region
    $region10: #{tpu_custom_call.1} parent=1 // pred_check
      _
    $region11: #{tpu_custom_call.1} parent=1 // pred_check_branch
      %14 = sbr.rel (0) target = $region13
    $region12: #{tpu_custom_call.1} parent=1 // pred_region
      _
    $region13: #{tpu_custom_call.1} parent=1 // pred_fallthru
      _
    %v15 = vld [vmem:[%s0] sm:$0xff]
    %v16 = vld [vmem:[%s0 + $0x8] sm:$0xff]
    %v17 = vld [vmem:[%s1] sm:$0xff]
    %v18 = vld [vmem:[%s1 + $0x8] sm:$0xff]
    %v19 = vld [vmem:[%s1 + $0x10] sm:$0xff]
    %v20 = vld [vmem:[%s1 + $0x18] sm:$0xff]
    %v21 = vld [vmem:[%s2] sm:$0x1]
    %v23 = vlaneseq
    %v24 = vshrl.u32 %v23, 7
    %v25 = vsub.s32 0, %v24
    %v26 = vrot.slane %v21, %v25
    %vm28 = vcmask 261120
    %v30 = vsel %vm28, %v15, 0
    %v33 = vsel %vm28, %v16, 0
    %35 = vmatprep.subr.mxu0 0.0
    %36 = vmatpush1.msra.mxu0 0.0
    %37 = vmatprep.subr.mxu0 0.0
    %38 = vmatpush1.msra.mxu0 0.0
    %39 = vmatprep.subr.mxu0 0.0
    %40 = vmatpush1.msra.mxu0 0.0
    %41 = vmatprep.subr.mxu0 0.0
    %42 = vmatpush1.msra.mxu0 0.0
    %43 = vmatprep.subr.mxu0 0.0
    %44 = vmatpush1.msra.mxu0 0.0
    %45 = vmatprep.subr.mxu0 0.0
    %46 = vmatpush1.msra.mxu0 0.0
    %47 = vmatprep.subr.mxu0 0.0
    %48 = vmatpush1.msra.mxu0 0.0
    %49 = vmatprep.subr.mxu0 0.0
    %50 = vmatpush1.msra.mxu0 0.0
    %51 = vmatprep.subr.mxu0 0.0
    %52 = vmatpush1.msra.mxu0 0.0
    %53 = vmatprep.subr.mxu0 0.0
    %54 = vmatpush1.msra.mxu0 0.0
    %55 = vmatprep.subr.mxu0 0.0
    %56 = vmatpush1.msra.mxu0 0.0
    %57 = vmatprep.subr.mxu0 0.0
    %58 = vmatpush1.msra.mxu0 0.0
    %59 = vmatprep.subr.mxu0 0.0
    %60 = vmatpush1.msra.mxu0 %v20
    %61 = vmatprep.subr.mxu0 0.0
    %62 = vmatpush1.msra.mxu0 %v19
    %63 = vmatprep.subr.mxu0 0.0
    %64 = vmatpush1.msra.mxu0 %v18
    %65 = vmatprep.subr.mxu0 0.0
    %66 = vmatpush1.msra.mxu0 %v17
    %67 = vmatprep.subr.mxu0 0.0
    %68 = vmatpush2.msra.mxu0 0.0
    %69 = vmatprep.subr.mxu0 0.0
    %70 = vmatpush2.msra.mxu0 0.0
    %71 = vmatprep.subr.mxu0 0.0
    %72 = vmatpush2.msra.mxu0 0.0
    %73 = vmatprep.subr.mxu0 0.0
    %74 = vmatpush2.msra.mxu0 0.0
    %75 = vmatprep.subr.mxu0 0.0
    %76 = vmatpush2.msra.mxu0 0.0
    %77 = vmatprep.subr.mxu0 0.0
    %78 = vmatpush2.msra.mxu0 0.0
    %79 = vmatprep.subr.mxu0 0.0
    %80 = vmatpush2.msra.mxu0 0.0
    %81 = vmatprep.subr.mxu0 0.0
    %82 = vmatpush2.msra.mxu0 0.0
    %83 = vmatprep.subr.mxu0 0.0
    %84 = vmatpush2.msra.mxu0 0.0
    %85 = vmatprep.subr.mxu0 0.0
    %86 = vmatpush2.msra.mxu0 0.0
    %87 = vmatprep.subr.mxu0 0.0
    %88 = vmatpush2.msra.mxu0 0.0
    %89 = vmatprep.subr.mxu0 0.0
    %90 = vmatpush2.msra.mxu0 0.0
    %91 = vmatprep.subr.mxu0 0.0
    %92 = vmatpush2.msra.mxu0 0.0
    %93 = vmatprep.subr.mxu0 0.0
    %94 = vmatpush2.msra.mxu0 0.0
    %95 = vmatprep.subr.mxu0 0.0
    %96 = vmatpush2.msra.mxu0 0.0
    %97 = vmatprep.subr.mxu0 0.0
    %98 = vmatpush2.msra.mxu0 0.0
    %99 = vmatprep.mubr.f32.mxu0 0.0
    %100 = vmatmul.mubr.f32.gmra.mxu0 %v30
    %v101 = vpop.f32.mrf.mxu0
    %v102 = vadd.f32 %v26, %v101
    %v103 = vpop.f32.mrf.mxu0
    %104 = vmatprep.mubr.f32.mxu0 0.0
    %105 = vmatmul.mubr.f32.gmra.mxu0 %v33
    %v106 = vpop.f32.mrf.mxu0
    %v107 = vadd.f32 %v26, %v106
    %v108 = vpop.f32.mrf.mxu0
    %109 = vdwg.mxu0
    %vm110 = vcmask 130048
    %111 = vst.msk [vmem:[#allocation2] sm:$0xff] %vm110, %v102
    %112 = vst.msk [vmem:[#allocation2 + $0x8] sm:$0xff] %vm110, %v107
    // Predicated region
    $region14: #{tpu_custom_call.1} parent=1 // pred_check
      _
    $region15: #{tpu_custom_call.1} parent=1 // pred_check_branch
      %114 = sbr.rel (0) target = $region17
    $region16: #{tpu_custom_call.1} parent=1 // pred_region
      %s116 = ssub.s32 256, 256
      %117 = vsyncadd [#allocation3], %s116
      %s118 = sshll.u32 [#allocation2], 4
      %s119 = int_to_ptr.vmem [resolvable:$true] %s118
      %124 = dma.vmem_to_hbm [thread:$0]  %s119, 256, %s3, [#allocation3], 128, 128, 8
    $region17: #{tpu_custom_call.1} parent=1 // pred_fallthru
      _
    // Predicated region
    $region18: #{tpu_custom_call.1} parent=1 // pred_check
      _
    $region19: #{tpu_custom_call.1} parent=1 // pred_check_branch
      %126 = sbr.rel (0) target = $region21
    $region20: #{tpu_custom_call.1} parent=1 // pred_region
      %127 = dma.done [#allocation3], 256
    $region21: #{tpu_custom_call.1} parent=1 // pred_fallthru
      _
    %128 = vsyncpa [#allocation3], 1

</llo_original>
